<compile_context>
chip_gen: v7x
topology: tpu7x:2x2x1
jax: 0.10.0
libtpu: 0.0.40
codegen_flags: <defaults>
</compile_context>

<pallas_src>
import functools
import math

import jax
import jax.numpy as jnp
from jax.experimental import pallas as pl
from jax.experimental.pallas import tpu as pltpu


def _critic_kernel(n_layers, x_ref, *refs):
    """Fused MLP forward on one batch tile (batch along lanes).

    x_ref : (Y, TM)  bf16
    refs  : w0 (H, Y) bf16, b0 (H, 1) f32,
            [wi (H, H) bf16, bi (H, 1) f32] * n_layers,
            wo (H, 1) f32,  bo (1, 1) f32,
            o_ref (1, TM) f32
    """
    o_ref = refs[-1]
    p = refs[:-1]

    # Layer 0: Linear(y, hidden) + ReLU.   (H, Y) @ (Y, TM) -> (H, TM), f32 acc.
    h = jnp.dot(p[0][...], x_ref[...], preferred_element_type=jnp.float32)
    h = jnp.maximum(h + p[1][...], 0.0)

    # Hidden layers: Linear(hidden, hidden) + LeakyReLU(0.01, PyTorch default).
    for l in range(n_layers):
        w = p[2 + 2 * l][...]
        b = p[3 + 2 * l][...]
        h = jnp.dot(w, h.astype(w.dtype), preferred_element_type=jnp.float32) + b
        h = jnp.where(h > 0.0, h, 0.01 * h)

    # Output head Linear(hidden, 1): VPU multiply + sublane reduction (keeps the
    # MXU free and produces a naturally lane-dense (1, TM) result).
    wo = p[-2][...]            # (H, 1) f32, broadcasts along lanes
    bo = p[-1][...]            # (1, 1) f32
    out = jnp.sum(h * wo, axis=0, keepdims=True) + bo    # (1, TM)
    o_ref[...] = out.astype(o_ref.dtype)


def critic_forward(x, params, n_layers, *, tile_b=512):
    """x: [B, y] float32.

    params: list of (W, b) pairs in PyTorch layout (W: [out, in], b: [out]),
    ordered [layer0, hidden_1..hidden_n, output].  Returns [B, 1] float32.
    """
    assert tile_b % 128 == 0 and tile_b >= 128
    B, Y = x.shape
    hidden = params[0][0].shape[0]

    # Batch tile: multiple of 128 (lane width), capped at tile_b.
    tm = min(int(tile_b), pl.cdiv(B, 128) * 128)
    num_tiles = pl.cdiv(B, tm)
    b_pad = num_tiles * tm

    # Lane-major input (Y, B_pad) in bf16; wrapper-side pad/transpose is layout
    # plumbing. Padded rows are computed and sliced off afterwards.
    x_t = jnp.pad(x, ((0, b_pad - B), (0, 0))).astype(jnp.bfloat16).T

    flat_params = []
    for i, (w, b) in enumerate(params):
        if i == len(params) - 1:               # output head: stays f32 (VPU epilogue)
            flat_params.append(jnp.asarray(w, jnp.float32).reshape(hidden, 1))
            flat_params.append(jnp.asarray(b, jnp.float32).reshape(1, 1))
        else:
            flat_params.append(jnp.asarray(w, jnp.bfloat16))                 # (out, in)
            flat_params.append(jnp.asarray(b, jnp.float32).reshape(-1, 1))   # (out, 1)

    in_specs = [pl.BlockSpec((Y, tm), lambda i: (0, i))]
    for prm in flat_params:
        # Constant index_map => DMA'd once, VMEM-resident across the batch grid.
        in_specs.append(pl.BlockSpec(prm.shape, lambda i: (0, 0)))

    out = pl.pallas_call(
        functools.partial(_critic_kernel, n_layers),
        out_shape=jax.ShapeDtypeStruct((1, b_pad), jnp.float32),
        grid_spec=pltpu.PrefetchScalarGridSpec(
            num_scalar_prefetch=0,
            grid=(num_tiles,),
            in_specs=in_specs,
            out_specs=pl.BlockSpec((1, tm), lambda i: (0, i)),
        ),
        compiler_params=pltpu.CompilerParams(
            dimension_semantics=("parallel",),
            vmem_limit_bytes=32 * 1024 * 1024,
        ),
    )(x_t, *flat_params)

    return out[0, :B].reshape(B, 1)


def init_critic_params(key, y, hidden_dim, n_layers):
    """nn.Linear-style init U(-1/sqrt(fan_in), 1/sqrt(fan_in)); PyTorch layout."""
    dims = [(y, hidden_dim)] + [(hidden_dim, hidden_dim)] * n_layers + [(hidden_dim, 1)]
    params = []
    for fan_in, fan_out in dims:
        key, kw, kb = jax.random.split(key, 3)
        bound = 1.0 / math.sqrt(fan_in)
        w = jax.random.uniform(kw, (fan_out, fan_in), jnp.float32, -bound, bound)
        b = jax.random.uniform(kb, (fan_out,), jnp.float32, -bound, bound)
        params.append((w, b))
    return params


def critic_reference(x, params, n_layers):
    """Pure-JAX reference mirroring the kernel's dtype handling."""
    h = x.astype(jnp.bfloat16)
    w0, b0 = params[0]
    h = jnp.dot(h, w0.astype(jnp.bfloat16).T,
                preferred_element_type=jnp.float32) + b0[None, :]
    h = jnp.maximum(h, 0.0)
    for l in range(n_layers):
        w, b = params[1 + l]
        h = jnp.dot(h.astype(jnp.bfloat16), w.astype(jnp.bfloat16).T,
                    preferred_element_type=jnp.float32) + b[None, :]
        h = jnp.where(h > 0.0, h, 0.01 * h)
    wo, bo = params[-1]
    return jnp.dot(h, wo.T) + bo[None, :]


if __name__ == "__main__":
    # Small shapes consistent with the module: y=8, hidden_dim=32, n_layers=3.
    # (The Critic.forward first argument is unused by the PyTorch module.)
    B, Y, HIDDEN, N_LAYERS = 8, 8, 32, 3

    key = jax.random.PRNGKey(0)
    key, kx = jax.random.split(key)
    x = jax.random.normal(kx, (B, Y), jnp.float32)
    params = init_critic_params(key, Y, HIDDEN, N_LAYERS)

    out = critic_forward(x, params, N_LAYERS)
    out = jax.block_until_ready(out)

    ref = critic_reference(x, params, N_LAYERS)
    assert out.shape == (B, 1)
    assert jnp.allclose(out, ref, atol=5e-3, rtol=5e-3), (out, ref)

    print("KERNEL_OK")
</pallas_src>

<mosaic_0001>
module attributes {stable_mosaic.version = 11 : i64} {
  func.func @_critic_kernel(%arg0: i32, %arg1: memref<8x128xbf16, #tpu.memory_space<vmem>>, %arg2: memref<32x8xbf16, #tpu.memory_space<vmem>>, %arg3: memref<32x1xf32, #tpu.memory_space<vmem>>, %arg4: memref<32x32xbf16, #tpu.memory_space<vmem>>, %arg5: memref<32x1xf32, #tpu.memory_space<vmem>>, %arg6: memref<32x32xbf16, #tpu.memory_space<vmem>>, %arg7: memref<32x1xf32, #tpu.memory_space<vmem>>, %arg8: memref<32x32xbf16, #tpu.memory_space<vmem>>, %arg9: memref<32x1xf32, #tpu.memory_space<vmem>>, %arg10: memref<32x1xf32, #tpu.memory_space<vmem>>, %arg11: memref<1x1xf32, #tpu.memory_space<vmem>>, %arg12: memref<1x128xf32, #tpu.memory_space<vmem>>) attributes {dimension_semantics = [#tpu.dimension_semantics<parallel>], iteration_bounds = array<i64: 1>, scalar_prefetch = 0 : i64, scratch_operands = 0 : i64, tpu.core_type = #tpu.core_type<tc>, window_params = [{transform_indices = @transform_0, window_bounds = array<i64: 8, 128>}, {pipeline_mode = #tpu.pipeline_mode<synchronous>, transform_indices = @transform_1, window_bounds = array<i64: 32, 8>}, {pipeline_mode = #tpu.pipeline_mode<synchronous>, transform_indices = @transform_2, window_bounds = array<i64: 32, 1>}, {pipeline_mode = #tpu.pipeline_mode<synchronous>, transform_indices = @transform_3, window_bounds = array<i64: 32, 32>}, {pipeline_mode = #tpu.pipeline_mode<synchronous>, transform_indices = @transform_4, window_bounds = array<i64: 32, 1>}, {pipeline_mode = #tpu.pipeline_mode<synchronous>, transform_indices = @transform_5, window_bounds = array<i64: 32, 32>}, {pipeline_mode = #tpu.pipeline_mode<synchronous>, transform_indices = @transform_6, window_bounds = array<i64: 32, 1>}, {pipeline_mode = #tpu.pipeline_mode<synchronous>, transform_indices = @transform_7, window_bounds = array<i64: 32, 32>}, {pipeline_mode = #tpu.pipeline_mode<synchronous>, transform_indices = @transform_8, window_bounds = array<i64: 32, 1>}, {pipeline_mode = #tpu.pipeline_mode<synchronous>, transform_indices = @transform_9, window_bounds = array<i64: 32, 1>}, {pipeline_mode = #tpu.pipeline_mode<synchronous>, transform_indices = @transform_10, window_bounds = array<i64: 1, 1>}, {transform_indices = @transform_11, window_bounds = array<i64: 1, 128>}]} {
    %c0 = arith.constant 0 : index
    %c0_0 = arith.constant 0 : index
    %0 = vector.load %arg2[%c0, %c0_0] : memref<32x8xbf16, #tpu.memory_space<vmem>>, vector<32x8xbf16>
    %c0_1 = arith.constant 0 : index
    %c0_2 = arith.constant 0 : index
    %1 = vector.load %arg1[%c0_1, %c0_2] : memref<8x128xbf16, #tpu.memory_space<vmem>>, vector<8x128xbf16>
    %cst = arith.constant dense<0.000000e+00> : vector<32x128xf32>
    %2 = tpu.matmul %0, %1, %cst {dimension_numbers = #tpu.dot_dimension_numbers<[1], [0], [0], [1], [0, 0, 1, 1], [], []>} : vector<32x8xbf16>, vector<8x128xbf16>, vector<32x128xf32> -> vector<32x128xf32>
    %c0_3 = arith.constant 0 : index
    %c0_4 = arith.constant 0 : index
    %3 = vector.load %arg3[%c0_3, %c0_4] : memref<32x1xf32, #tpu.memory_space<vmem>>, vector<32x1xf32>
    %4 = vector.broadcast %3 : vector<32x1xf32> to vector<32x128xf32>
    %5 = arith.addf %2, %4 : vector<32x128xf32>
    %cst_5 = arith.constant 0.000000e+00 : f32
    %6 = vector.broadcast %cst_5 : f32 to vector<32x128xf32>
    %7 = arith.maximumf %5, %6 : vector<32x128xf32>
    %c0_6 = arith.constant 0 : index
    %c0_7 = arith.constant 0 : index
    %8 = vector.load %arg4[%c0_6, %c0_7] : memref<32x32xbf16, #tpu.memory_space<vmem>>, vector<32x32xbf16>
    %c0_8 = arith.constant 0 : index
    %c0_9 = arith.constant 0 : index
    %9 = vector.load %arg5[%c0_8, %c0_9] : memref<32x1xf32, #tpu.memory_space<vmem>>, vector<32x1xf32>
    %10 = arith.truncf %7 : vector<32x128xf32> to vector<32x128xbf16>
    %cst_10 = arith.constant dense<0.000000e+00> : vector<32x128xf32>
    %11 = tpu.matmul %8, %10, %cst_10 {dimension_numbers = #tpu.dot_dimension_numbers<[1], [0], [0], [1], [0, 0, 1, 1], [], []>} : vector<32x32xbf16>, vector<32x128xbf16>, vector<32x128xf32> -> vector<32x128xf32>
    %12 = vector.broadcast %9 : vector<32x1xf32> to vector<32x128xf32>
    %13 = arith.addf %11, %12 : vector<32x128xf32>
    %cst_11 = arith.constant 0.000000e+00 : f32
    %14 = vector.broadcast %cst_11 : f32 to vector<32x128xf32>
    %15 = arith.cmpf ogt, %13, %14 : vector<32x128xf32>
    %cst_12 = arith.constant 0.00999999977 : f32
    %16 = vector.broadcast %cst_12 : f32 to vector<32x128xf32>
    %17 = arith.mulf %16, %13 : vector<32x128xf32>
    %18 = arith.select %15, %13, %17 : vector<32x128xi1>, vector<32x128xf32>
    %c0_13 = arith.constant 0 : index
    %c0_14 = arith.constant 0 : index
    %19 = vector.load %arg6[%c0_13, %c0_14] : memref<32x32xbf16, #tpu.memory_space<vmem>>, vector<32x32xbf16>
    %c0_15 = arith.constant 0 : index
    %c0_16 = arith.constant 0 : index
    %20 = vector.load %arg7[%c0_15, %c0_16] : memref<32x1xf32, #tpu.memory_space<vmem>>, vector<32x1xf32>
    %21 = arith.truncf %18 : vector<32x128xf32> to vector<32x128xbf16>
    %cst_17 = arith.constant dense<0.000000e+00> : vector<32x128xf32>
    %22 = tpu.matmul %19, %21, %cst_17 {dimension_numbers = #tpu.dot_dimension_numbers<[1], [0], [0], [1], [0, 0, 1, 1], [], []>} : vector<32x32xbf16>, vector<32x128xbf16>, vector<32x128xf32> -> vector<32x128xf32>
    %23 = vector.broadcast %20 : vector<32x1xf32> to vector<32x128xf32>
    %24 = arith.addf %22, %23 : vector<32x128xf32>
    %cst_18 = arith.constant 0.000000e+00 : f32
    %25 = vector.broadcast %cst_18 : f32 to vector<32x128xf32>
    %26 = arith.cmpf ogt, %24, %25 : vector<32x128xf32>
    %cst_19 = arith.constant 0.00999999977 : f32
    %27 = vector.broadcast %cst_19 : f32 to vector<32x128xf32>
    %28 = arith.mulf %27, %24 : vector<32x128xf32>
    %29 = arith.select %26, %24, %28 : vector<32x128xi1>, vector<32x128xf32>
    %c0_20 = arith.constant 0 : index
    %c0_21 = arith.constant 0 : index
    %30 = vector.load %arg8[%c0_20, %c0_21] : memref<32x32xbf16, #tpu.memory_space<vmem>>, vector<32x32xbf16>
    %c0_22 = arith.constant 0 : index
    %c0_23 = arith.constant 0 : index
    %31 = vector.load %arg9[%c0_22, %c0_23] : memref<32x1xf32, #tpu.memory_space<vmem>>, vector<32x1xf32>
    %32 = arith.truncf %29 : vector<32x128xf32> to vector<32x128xbf16>
    %cst_24 = arith.constant dense<0.000000e+00> : vector<32x128xf32>
    %33 = tpu.matmul %30, %32, %cst_24 {dimension_numbers = #tpu.dot_dimension_numbers<[1], [0], [0], [1], [0, 0, 1, 1], [], []>} : vector<32x32xbf16>, vector<32x128xbf16>, vector<32x128xf32> -> vector<32x128xf32>
    %34 = vector.broadcast %31 : vector<32x1xf32> to vector<32x128xf32>
    %35 = arith.addf %33, %34 : vector<32x128xf32>
    %cst_25 = arith.constant 0.000000e+00 : f32
    %36 = vector.broadcast %cst_25 : f32 to vector<32x128xf32>
    %37 = arith.cmpf ogt, %35, %36 : vector<32x128xf32>
    %cst_26 = arith.constant 0.00999999977 : f32
    %38 = vector.broadcast %cst_26 : f32 to vector<32x128xf32>
    %39 = arith.mulf %38, %35 : vector<32x128xf32>
    %40 = arith.select %37, %35, %39 : vector<32x128xi1>, vector<32x128xf32>
    %c0_27 = arith.constant 0 : index
    %c0_28 = arith.constant 0 : index
    %41 = vector.load %arg10[%c0_27, %c0_28] : memref<32x1xf32, #tpu.memory_space<vmem>>, vector<32x1xf32>
    %c0_29 = arith.constant 0 : index
    %c0_30 = arith.constant 0 : index
    %42 = vector.load %arg11[%c0_29, %c0_30] : memref<1x1xf32, #tpu.memory_space<vmem>>, vector<1x1xf32>
    %43 = vector.broadcast %41 : vector<32x1xf32> to vector<32x128xf32>
    %44 = arith.mulf %40, %43 : vector<32x128xf32>
    %cst_31 = arith.constant dense<0.000000e+00> : vector<128xf32>
    %45 = vector.multi_reduction <add>, %44, %cst_31 [0] : vector<32x128xf32> to vector<128xf32>
    %46 = vector.shape_cast %45 : vector<128xf32> to vector<1x128xf32>
    %47 = vector.broadcast %42 : vector<1x1xf32> to vector<1x128xf32>
    %48 = arith.addf %46, %47 : vector<1x128xf32>
    %c0_32 = arith.constant 0 : index
    %c0_33 = arith.constant 0 : index
    %49 = vector.load %arg12[%c0_32, %c0_33] : memref<1x128xf32, #tpu.memory_space<vmem>>, vector<1x128xf32>
    tpu.vector_store %arg12[%c0_32, %c0_33], %48 {strides = array<i32>} : memref<1x128xf32, #tpu.memory_space<vmem>>, vector<1x128xf32>,
    return
  }
  func.func @transform_0(%arg0: i32) -> (i32, i32) {
    %c0_i32 = arith.constant 0 : i32
    %c0_i32_0 = arith.constant 0 : i32
    return %c0_i32, %arg0 : i32, i32
  }
  func.func @transform_1(%arg0: i32) -> (i32, i32) {
    %c0_i32 = arith.constant 0 : i32
    %c0_i32_0 = arith.constant 0 : i32
    %c0_i32_1 = arith.constant 0 : i32
    return %c0_i32, %c0_i32_0 : i32, i32
  }
  func.func @transform_2(%arg0: i32) -> (i32, i32) {
    %c0_i32 = arith.constant 0 : i32
    %c0_i32_0 = arith.constant 0 : i32
    %c0_i32_1 = arith.constant 0 : i32
    return %c0_i32, %c0_i32_0 : i32, i32
  }
  func.func @transform_3(%arg0: i32) -> (i32, i32) {
    %c0_i32 = arith.constant 0 : i32
    %c0_i32_0 = arith.constant 0 : i32
    %c0_i32_1 = arith.constant 0 : i32
    return %c0_i32, %c0_i32_0 : i32, i32
  }
  func.func @transform_4(%arg0: i32) -> (i32, i32) {
    %c0_i32 = arith.constant 0 : i32
    %c0_i32_0 = arith.constant 0 : i32
    %c0_i32_1 = arith.constant 0 : i32
    return %c0_i32, %c0_i32_0 : i32, i32
  }
  func.func @transform_5(%arg0: i32) -> (i32, i32) {
    %c0_i32 = arith.constant 0 : i32
    %c0_i32_0 = arith.constant 0 : i32
    %c0_i32_1 = arith.constant 0 : i32
    return %c0_i32, %c0_i32_0 : i32, i32
  }
  func.func @transform_6(%arg0: i32) -> (i32, i32) {
    %c0_i32 = arith.constant 0 : i32
    %c0_i32_0 = arith.constant 0 : i32
    %c0_i32_1 = arith.constant 0 : i32
    return %c0_i32, %c0_i32_0 : i32, i32
  }
  func.func @transform_7(%arg0: i32) -> (i32, i32) {
    %c0_i32 = arith.constant 0 : i32
    %c0_i32_0 = arith.constant 0 : i32
    %c0_i32_1 = arith.constant 0 : i32
    return %c0_i32, %c0_i32_0 : i32, i32
  }
  func.func @transform_8(%arg0: i32) -> (i32, i32) {
    %c0_i32 = arith.constant 0 : i32
    %c0_i32_0 = arith.constant 0 : i32
    %c0_i32_1 = arith.constant 0 : i32
    return %c0_i32, %c0_i32_0 : i32, i32
  }
  func.func @transform_9(%arg0: i32) -> (i32, i32) {
    %c0_i32 = arith.constant 0 : i32
    %c0_i32_0 = arith.constant 0 : i32
    %c0_i32_1 = arith.constant 0 : i32
    return %c0_i32, %c0_i32_0 : i32, i32
  }
  func.func @transform_10(%arg0: i32) -> (i32, i32) {
    %c0_i32 = arith.constant 0 : i32
    %c0_i32_0 = arith.constant 0 : i32
    %c0_i32_1 = arith.constant 0 : i32
    return %c0_i32, %c0_i32_0 : i32, i32
  }
  func.func @transform_11(%arg0: i32) -> (i32, i32) {
    %c0_i32 = arith.constant 0 : i32
    %c0_i32_0 = arith.constant 0 : i32
    return %c0_i32, %arg0 : i32, i32
  }
}

</mosaic_0001>

<llo_original>
// kernel: tpu_custom_call.1
$region0: #{tpu_custom_call.1}
  #allocation0 [shape = 'u32[]', space=smem, size = 0x4, offset = 0x4, fixed_abs, tag = 'smem constant byte address 0x4 - core index']
  #allocation1 [shape = 'u32[144,128]{1,0:T(1,128)}', space=vmem, size = 0x12000, scoped, tag = 'internal scratch']
  #allocation2 [shape = 'f32[1,1]{1,0:T(1,128)S(1)}', space=vmem, size = 0x200, scoped, tag = 'scoped memory for tpu_custom_call.1']
  %s0 = inlined_call_operand.vmem [shape: bf16[8,128], index: 0, kind: input, shape index: {}]
  %s1 = inlined_call_operand.vmem [shape: bf16[32,8], index: 1, kind: input, shape index: {}]
  %s2 = inlined_call_operand.vmem [shape: f32[32,1], index: 2, kind: input, shape index: {}]
  %s3 = inlined_call_operand.vmem [shape: bf16[32,32], index: 3, kind: input, shape index: {}]
  %s4 = inlined_call_operand.vmem [shape: f32[32,1], index: 4, kind: input, shape index: {}]
  %s5 = inlined_call_operand.vmem [shape: bf16[32,32], index: 5, kind: input, shape index: {}]
  %s6 = inlined_call_operand.vmem [shape: f32[32,1], index: 6, kind: input, shape index: {}]
  %s7 = inlined_call_operand.vmem [shape: bf16[32,32], index: 7, kind: input, shape index: {}]
  %s8 = inlined_call_operand.vmem [shape: f32[32,1], index: 8, kind: input, shape index: {}]
  %s9 = inlined_call_operand.vmem [shape: f32[32,1], index: 9, kind: input, shape index: {}]
  %s10 = inlined_call_operand.<no memory space> [shape: f32[1,1], index: 10, kind: input, shape index: {}]
  %s11 = inlined_call_operand.hbm [shape: f32[1,128], index: 11, kind: output, shape index: {}]
  %s12 = sld [smem:[#allocation0]]
  $region54: #{tpu_custom_call.1} parent=0
    _
  %s14 = ssub.s32 1, %s12
  %s15 = scalar_select 0, %s14, %s12
  %v16 = vstv %s10
  %17 = vst [vmem:[#allocation2] sm:$0x1] %v16
  $region1: #{tpu_custom_call.1} parent=0
    #allocation3 [shape = 'u8[512]{0}', space=vmem, size = 0x400, scoped, tag = 'output window, operand 0, single buffered']
    #allocation4 [shape = 's32[1]{0}', space=sflag, size = 0x4, scoped, tag = 'scoped memory for tpu_custom_call.1']
    %18 = vsyncpa [#allocation4], 0
    // Predicated region
    $region2: #{tpu_custom_call.1} parent=1 // pred_check
      _
    $region3: #{tpu_custom_call.1} parent=1 // pred_check_branch
      %20 = sbr.rel (0) target = $region5
    $region4: #{tpu_custom_call.1} parent=1 // pred_region
      _
    $region5: #{tpu_custom_call.1} parent=1 // pred_fallthru
      _
    // Predicated region
    $region6: #{tpu_custom_call.1} parent=1 // pred_check
      _
    $region7: #{tpu_custom_call.1} parent=1 // pred_check_branch
      %22 = sbr.rel (0) target = $region9
    $region8: #{tpu_custom_call.1} parent=1 // pred_region
      _
    $region9: #{tpu_custom_call.1} parent=1 // pred_fallthru
      _
    // Predicated region
    $region10: #{tpu_custom_call.1} parent=1 // pred_check
      _
    $region11: #{tpu_custom_call.1} parent=1 // pred_check_branch
      %24 = sbr.rel (0) target = $region13
    $region12: #{tpu_custom_call.1} parent=1 // pred_region
      _
    $region13: #{tpu_custom_call.1} parent=1 // pred_fallthru
      _
    // Predicated region
    $region14: #{tpu_custom_call.1} parent=1 // pred_check
      _
    $region15: #{tpu_custom_call.1} parent=1 // pred_check_branch
      %26 = sbr.rel (0) target = $region17
    $region16: #{tpu_custom_call.1} parent=1 // pred_region
      _
    $region17: #{tpu_custom_call.1} parent=1 // pred_fallthru
      _
    // Predicated region
    $region18: #{tpu_custom_call.1} parent=1 // pred_check
      _
    $region19: #{tpu_custom_call.1} parent=1 // pred_check_branch
      %28 = sbr.rel (0) target = $region21
    $region20: #{tpu_custom_call.1} parent=1 // pred_region
      _
    $region21: #{tpu_custom_call.1} parent=1 // pred_fallthru
      _
    // Predicated region
    $region22: #{tpu_custom_call.1} parent=1 // pred_check
      _
    $region23: #{tpu_custom_call.1} parent=1 // pred_check_branch
      %30 = sbr.rel (0) target = $region25
    $region24: #{tpu_custom_call.1} parent=1 // pred_region
      _
    $region25: #{tpu_custom_call.1} parent=1 // pred_fallthru
      _
    // Predicated region
    $region26: #{tpu_custom_call.1} parent=1 // pred_check
      _
    $region27: #{tpu_custom_call.1} parent=1 // pred_check_branch
      %32 = sbr.rel (0) target = $region29
    $region28: #{tpu_custom_call.1} parent=1 // pred_region
      _
    $region29: #{tpu_custom_call.1} parent=1 // pred_fallthru
      _
    // Predicated region
    $region30: #{tpu_custom_call.1} parent=1 // pred_check
      _
    $region31: #{tpu_custom_call.1} parent=1 // pred_check_branch
      %34 = sbr.rel (0) target = $region33
    $region32: #{tpu_custom_call.1} parent=1 // pred_region
      _
    $region33: #{tpu_custom_call.1} parent=1 // pred_fallthru
      _
    // Predicated region
    $region34: #{tpu_custom_call.1} parent=1 // pred_check
      _
    $region35: #{tpu_custom_call.1} parent=1 // pred_check_branch
      %36 = sbr.rel (0) target = $region37
    $region36: #{tpu_custom_call.1} parent=1 // pred_region
      _
    $region37: #{tpu_custom_call.1} parent=1 // pred_fallthru
      _
    // Predicated region
    $region38: #{tpu_custom_call.1} parent=1 // pred_check
      _
    $region39: #{tpu_custom_call.1} parent=1 // pred_check_branch
      %38 = sbr.rel (0) target = $region41
    $region40: #{tpu_custom_call.1} parent=1 // pred_region
      _
    $region41: #{tpu_custom_call.1} parent=1 // pred_fallthru
      _
    // Predicated region
    $region42: #{tpu_custom_call.1} parent=1 // pred_check
      _
    $region43: #{tpu_custom_call.1} parent=1 // pred_check_branch
      %40 = sbr.rel (0) target = $region45
    $region44: #{tpu_custom_call.1} parent=1 // pred_region
      _
    $region45: #{tpu_custom_call.1} parent=1 // pred_fallthru
      _
    %v42 = vld [vmem:[%s1] sm:$0xf]
    %v43 = vld [vmem:[%s1 + $0x4] sm:$0xf]
    %v44 = vld [vmem:[%s1 + $0x8] sm:$0xf]
    %v45 = vld [vmem:[%s1 + $0xc] sm:$0xf]
    %v46 = vld [vmem:[%s0] sm:$0xf]
    %v47 = vld [vmem:[%s2] sm:$0xff]
    %v48 = vld [vmem:[%s2 + $0x8] sm:$0xff]
    %v49 = vld [vmem:[%s2 + $0x10] sm:$0xff]
    %v50 = vld [vmem:[%s2 + $0x18] sm:$0xff]
    %52 = vset.pattern.permute.xlu0 0
    %53 = vperm.xlu0 %52, %v47
    %v54 = vpop.permute.xlu0 %53
    %57 = vset.pattern.permute.xlu0 0
    %58 = vperm.xlu0 %57, %v48
    %v59 = vpop.permute.xlu0 %58
    %62 = vset.pattern.permute.xlu0 0
    %63 = vperm.xlu0 %62, %v49
    %v64 = vpop.permute.xlu0 %63
    %67 = vset.pattern.permute.xlu0 0
    %68 = vperm.xlu0 %67, %v50
    %v69 = vpop.permute.xlu0 %68
    %v75 = vunpack.c.l.b16 %v42
    %v76 = vunpack.c.l.b16 %v43
    %v77 = vunpack.c.l.b16 %v44
    %v78 = vunpack.c.l.b16 %v45
    %v79 = vpack.c.b16 %v76, %v75
    %v80 = vpack.c.b16 %v78, %v77
    %vm81 = vcmask 64512
    %v83 = vsel %vm81, %v79, 0
    %v86 = vsel %vm81, %v80, 0
    %vm88 = vcmask 1043456
    %v90 = vsel %vm88, %v46, 0
    %92 = vmatprep.subr.bf16.mxu0 0
    %93 = vmatpush1.bf16.msra.mxu0 %v90
    %94 = vmatprep.subr.bf16.mxu0 0
    %95 = vmatpush1.bf16.msra.mxu0 0
    %96 = vmatprep.subr.bf16.mxu0 0
    %97 = vmatpush1.bf16.msra.mxu0 0
    %98 = vmatprep.subr.bf16.mxu0 0
    %99 = vmatpush1.bf16.msra.mxu0 0
    %100 = vmatprep.subr.bf16.mxu0 0
    %101 = vmatpush1.bf16.msra.mxu0 0
    %102 = vmatprep.subr.bf16.mxu0 0
    %103 = vmatpush1.bf16.msra.mxu0 0
    %104 = vmatprep.subr.bf16.mxu0 0
    %105 = vmatpush1.bf16.msra.mxu0 0
    %106 = vmatprep.subr.bf16.mxu0 0
    %107 = vmatpush1.bf16.msra.mxu0 0
    %108 = vmatprep.subr.bf16.mxu0 0
    %109 = vmatpush1.bf16.msra.mxu0 0
    %110 = vmatprep.subr.bf16.mxu0 0
    %111 = vmatpush1.bf16.msra.mxu0 0
    %112 = vmatprep.subr.bf16.mxu0 0
    %113 = vmatpush1.bf16.msra.mxu0 0
    %114 = vmatprep.subr.bf16.mxu0 0
    %115 = vmatpush1.bf16.msra.mxu0 0
    %116 = vmatprep.subr.bf16.mxu0 0
    %117 = vmatpush1.bf16.msra.mxu0 0
    %118 = vmatprep.subr.bf16.mxu0 0
    %119 = vmatpush1.bf16.msra.mxu0 0
    %120 = vmatprep.subr.bf16.mxu0 0
    %121 = vmatpush1.bf16.msra.mxu0 0
    %122 = vmatprep.subr.bf16.mxu0 0
    %123 = vmatpush1.bf16.msra.mxu0 0
    %124 = vmatprep.mubr.bf16.mxu0 0
    %125 = vmatmul.mubr.bf16.gmra.mrb[0].mxu0 %v83
    %v126 = vpop.f32.mrb[0].mxu0
    %v127 = vadd.f32 %v54, %v126
    %v128 = vpop.f32.mrb[0].mxu0
    %v129 = vpop.f32.mrb[0].mxu0
    %v130 = vadd.f32 %v59, %v129
    %v131 = vpop.f32.mrb[0].mxu0
    %132 = vmatprep.mubr.bf16.mxu0 0
    %133 = vmatmul.mubr.bf16.gmra.mrb[0].mxu0 %v86
    %v134 = vpop.f32.mrb[0].mxu0
    %v135 = vadd.f32 %v64, %v134
    %v136 = vpop.f32.mrb[0].mxu0
    %v137 = vpop.f32.mrb[0].mxu0
    %v138 = vadd.f32 %v69, %v137
    %v139 = vpop.f32.mrb[0].mxu0
    %140 = vdwg.mxu0
    %v141 = vmax.f32 %v127, 0.0
    %v142 = vmax.f32 %v130, 0.0
    %v143 = vmax.f32 %v135, 0.0
    %v144 = vmax.f32 %v138, 0.0
    %v145 = vld [vmem:[%s3] sm:$0xf]
    %v146 = vld [vmem:[%s3 + $0x4] sm:$0xf]
    %v147 = vld [vmem:[%s3 + $0x8] sm:$0xf]
    %v148 = vld [vmem:[%s3 + $0xc] sm:$0xf]
    %v149 = vld [vmem:[%s4] sm:$0xff]
    %v150 = vld [vmem:[%s4 + $0x8] sm:$0xff]
    %v151 = vld [vmem:[%s4 + $0x10] sm:$0xff]
    %v152 = vld [vmem:[%s4 + $0x18] sm:$0xff]
    %v153 = vpack.c.bf16 %v142, %v141
    %v154 = vpack.c.bf16 %v144, %v143
    %156 = vset.pattern.permute.xlu0 0
    %157 = vperm.xlu0 %156, %v149
    %v158 = vpop.permute.xlu0 %157
    %161 = vset.pattern.permute.xlu0 0
    %162 = vperm.xlu0 %161, %v150
    %v163 = vpop.permute.xlu0 %162
    %166 = vset.pattern.permute.xlu0 0
    %167 = vperm.xlu0 %166, %v151
    %v168 = vpop.permute.xlu0 %167
    %171 = vset.pattern.permute.xlu0 0
    %172 = vperm.xlu0 %171, %v152
    %v173 = vpop.permute.xlu0 %172
    %v179 = vunpack.c.l.b16 %v145
    %v180 = vunpack.c.l.b16 %v146
    %v181 = vunpack.c.l.b16 %v147
    %v182 = vunpack.c.l.b16 %v148
    %v183 = vpack.c.b16 %v180, %v179
    %v184 = vpack.c.b16 %v182, %v181
    %vm185 = vcmask 261120
    %v187 = vsel %vm185, %v183, 0
    %v190 = vsel %vm185, %v184, 0
    %192 = vmatprep.subr.bf16.mxu0 0
    %193 = vmatpush1.bf16.msra.mxu0 %v153
    %194 = vmatprep.subr.bf16.mxu0 0
    %195 = vmatpush1.bf16.msra.mxu0 %v154
    %196 = vmatprep.subr.bf16.mxu0 0
    %197 = vmatpush1.bf16.msra.mxu0 0
    %198 = vmatprep.subr.bf16.mxu0 0
    %199 = vmatpush1.bf16.msra.mxu0 0
    %200 = vmatprep.subr.bf16.mxu0 0
    %201 = vmatpush1.bf16.msra.mxu0 0
    %202 = vmatprep.subr.bf16.mxu0 0
    %203 = vmatpush1.bf16.msra.mxu0 0
    %204 = vmatprep.subr.bf16.mxu0 0
    %205 = vmatpush1.bf16.msra.mxu0 0
    %206 = vmatprep.subr.bf16.mxu0 0
    %207 = vmatpush1.bf16.msra.mxu0 0
    %208 = vmatprep.subr.bf16.mxu0 0
    %209 = vmatpush1.bf16.msra.mxu0 0
    %210 = vmatprep.subr.bf16.mxu0 0
    %211 = vmatpush1.bf16.msra.mxu0 0
    %212 = vmatprep.subr.bf16.mxu0 0
    %213 = vmatpush1.bf16.msra.mxu0 0
    %214 = vmatprep.subr.bf16.mxu0 0
    %215 = vmatpush1.bf16.msra.mxu0 0
    %216 = vmatprep.subr.bf16.mxu0 0
    %217 = vmatpush1.bf16.msra.mxu0 0
    %218 = vmatprep.subr.bf16.mxu0 0
    %219 = vmatpush1.bf16.msra.mxu0 0
    %220 = vmatprep.subr.bf16.mxu0 0
    %221 = vmatpush1.bf16.msra.mxu0 0
    %222 = vmatprep.subr.bf16.mxu0 0
    %223 = vmatpush1.bf16.msra.mxu0 0
    %224 = vmatprep.mubr.bf16.mxu0 0
    %225 = vmatmul.mubr.bf16.gmra.mrb[0].mxu0 %v187
    %v226 = vpop.f32.mrb[0].mxu0
    %v227 = vadd.f32 %v158, %v226
    %v228 = vpop.f32.mrb[0].mxu0
    %v229 = vpop.f32.mrb[0].mxu0
    %v230 = vadd.f32 %v163, %v229
    %v231 = vpop.f32.mrb[0].mxu0
    %232 = vmatprep.mubr.bf16.mxu0 0
    %233 = vmatmul.mubr.bf16.gmra.mrb[0].mxu0 %v190
    %v234 = vpop.f32.mrb[0].mxu0
    %v235 = vadd.f32 %v168, %v234
    %v236 = vpop.f32.mrb[0].mxu0
    %v237 = vpop.f32.mrb[0].mxu0
    %v238 = vadd.f32 %v173, %v237
    %v239 = vpop.f32.mrb[0].mxu0
    %240 = vdwg.mxu0
    %vm241 = vcmp.gt.f32.partialorder %v227, 0.0
    %vm242 = vcmp.gt.f32.partialorder %v230, 0.0
    %vm243 = vcmp.gt.f32.partialorder %v235, 0.0
    %vm244 = vcmp.gt.f32.partialorder %v238, 0.0
    %v245 = vmul.f32 %v227, 0.01
    %v246 = vmul.f32 %v230, 0.01
    %v247 = vmul.f32 %v235, 0.01
    %v248 = vmul.f32 %v238, 0.01
    %v249 = vsel %vm241, %v227, %v245
    %v250 = vsel %vm242, %v230, %v246
    %v251 = vsel %vm243, %v235, %v247
    %v252 = vsel %vm244, %v238, %v248
    %v253 = vld [vmem:[%s5] sm:$0xf]
    %v254 = vld [vmem:[%s5 + $0x4] sm:$0xf]
    %v255 = vld [vmem:[%s5 + $0x8] sm:$0xf]
    %v256 = vld [vmem:[%s5 + $0xc] sm:$0xf]
    %v257 = vld [vmem:[%s6] sm:$0xff]
    %v258 = vld [vmem:[%s6 + $0x8] sm:$0xff]
    %v259 = vld [vmem:[%s6 + $0x10] sm:$0xff]
    %v260 = vld [vmem:[%s6 + $0x18] sm:$0xff]
    %v261 = vpack.c.bf16 %v250, %v249
    %v262 = vpack.c.bf16 %v252, %v251
    %264 = vset.pattern.permute.xlu0 0
    %265 = vperm.xlu0 %264, %v257
    %v266 = vpop.permute.xlu0 %265
    %269 = vset.pattern.permute.xlu0 0
    %270 = vperm.xlu0 %269, %v258
    %v271 = vpop.permute.xlu0 %270
    %274 = vset.pattern.permute.xlu0 0
    %275 = vperm.xlu0 %274, %v259
    %v276 = vpop.permute.xlu0 %275
    %279 = vset.pattern.permute.xlu0 0
    %280 = vperm.xlu0 %279, %v260
    %v281 = vpop.permute.xlu0 %280
    %v287 = vunpack.c.l.b16 %v253
    %v288 = vunpack.c.l.b16 %v254
    %v289 = vunpack.c.l.b16 %v255
    %v290 = vunpack.c.l.b16 %v256
    %v291 = vpack.c.b16 %v288, %v287
    %v292 = vpack.c.b16 %v290, %v289
    %v294 = vsel %vm185, %v291, 0
    %v297 = vsel %vm185, %v292, 0
    %299 = vmatprep.subr.bf16.mxu0 0
    %300 = vmatpush1.bf16.msra.mxu0 %v261
    %301 = vmatprep.subr.bf16.mxu0 0
    %302 = vmatpush1.bf16.msra.mxu0 %v262
    %303 = vmatprep.subr.bf16.mxu0 0
    %304 = vmatpush1.bf16.msra.mxu0 0
    %305 = vmatprep.subr.bf16.mxu0 0
    %306 = vmatpush1.bf16.msra.mxu0 0
    %307 = vmatprep.subr.bf16.mxu0 0
    %308 = vmatpush1.bf16.msra.mxu0 0
    %309 = vmatprep.subr.bf16.mxu0 0
    %310 = vmatpush1.bf16.msra.mxu0 0
    %311 = vmatprep.subr.bf16.mxu0 0
    %312 = vmatpush1.bf16.msra.mxu0 0
    %313 = vmatprep.subr.bf16.mxu0 0
    %314 = vmatpush1.bf16.msra.mxu0 0
    %315 = vmatprep.subr.bf16.mxu0 0
    %316 = vmatpush1.bf16.msra.mxu0 0
    %317 = vmatprep.subr.bf16.mxu0 0
    %318 = vmatpush1.bf16.msra.mxu0 0
    %319 = vmatprep.subr.bf16.mxu0 0
    %320 = vmatpush1.bf16.msra.mxu0 0
    %321 = vmatprep.subr.bf16.mxu0 0
    %322 = vmatpush1.bf16.msra.mxu0 0
    %323 = vmatprep.subr.bf16.mxu0 0
    %324 = vmatpush1.bf16.msra.mxu0 0
    %325 = vmatprep.subr.bf16.mxu0 0
    %326 = vmatpush1.bf16.msra.mxu0 0
    %327 = vmatprep.subr.bf16.mxu0 0
    %328 = vmatpush1.bf16.msra.mxu0 0
    %329 = vmatprep.subr.bf16.mxu0 0
    %330 = vmatpush1.bf16.msra.mxu0 0
    %331 = vmatprep.mubr.bf16.mxu0 0
    %332 = vmatmul.mubr.bf16.gmra.mrb[0].mxu0 %v294
    %v333 = vpop.f32.mrb[0].mxu0
    %v334 = vadd.f32 %v266, %v333
    %v335 = vpop.f32.mrb[0].mxu0
    %v336 = vpop.f32.mrb[0].mxu0
    %v337 = vadd.f32 %v271, %v336
    %v338 = vpop.f32.mrb[0].mxu0
    %339 = vmatprep.mubr.bf16.mxu0 0
    %340 = vmatmul.mubr.bf16.gmra.mrb[0].mxu0 %v297
    %v341 = vpop.f32.mrb[0].mxu0
    %v342 = vadd.f32 %v276, %v341
    %v343 = vpop.f32.mrb[0].mxu0
    %v344 = vpop.f32.mrb[0].mxu0
    %v345 = vadd.f32 %v281, %v344
    %v346 = vpop.f32.mrb[0].mxu0
    %347 = vdwg.mxu0
    %vm348 = vcmp.gt.f32.partialorder %v334, 0.0
    %vm349 = vcmp.gt.f32.partialorder %v337, 0.0
    %vm350 = vcmp.gt.f32.partialorder %v342, 0.0
    %vm351 = vcmp.gt.f32.partialorder %v345, 0.0
    %v352 = vmul.f32 %v334, 0.01
    %v353 = vmul.f32 %v337, 0.01
    %v354 = vmul.f32 %v342, 0.01
    %v355 = vmul.f32 %v345, 0.01
    %v356 = vsel %vm348, %v334, %v352
    %v357 = vsel %vm349, %v337, %v353
    %v358 = vsel %vm350, %v342, %v354
    %v359 = vsel %vm351, %v345, %v355
    %v360 = vld [vmem:[%s7] sm:$0xf]
    %v361 = vld [vmem:[%s7 + $0x4] sm:$0xf]
    %v362 = vld [vmem:[%s7 + $0x8] sm:$0xf]
    %v363 = vld [vmem:[%s7 + $0xc] sm:$0xf]
    %v364 = vld [vmem:[%s8] sm:$0xff]
    %v365 = vld [vmem:[%s8 + $0x8] sm:$0xff]
    %v366 = vld [vmem:[%s8 + $0x10] sm:$0xff]
    %v367 = vld [vmem:[%s8 + $0x18] sm:$0xff]
    %v368 = vpack.c.bf16 %v357, %v356
    %v369 = vpack.c.bf16 %v359, %v358
    %371 = vset.pattern.permute.xlu0 0
    %372 = vperm.xlu0 %371, %v364
    %v373 = vpop.permute.xlu0 %372
    %376 = vset.pattern.permute.xlu0 0
    %377 = vperm.xlu0 %376, %v365
    %v378 = vpop.permute.xlu0 %377
    %381 = vset.pattern.permute.xlu0 0
    %382 = vperm.xlu0 %381, %v366
    %v383 = vpop.permute.xlu0 %382
    %386 = vset.pattern.permute.xlu0 0
    %387 = vperm.xlu0 %386, %v367
    %v388 = vpop.permute.xlu0 %387
    %v394 = vunpack.c.l.b16 %v360
    %v395 = vunpack.c.l.b16 %v361
    %v396 = vunpack.c.l.b16 %v362
    %v397 = vunpack.c.l.b16 %v363
    %v398 = vpack.c.b16 %v395, %v394
    %v399 = vpack.c.b16 %v397, %v396
    %v401 = vsel %vm185, %v398, 0
    %v404 = vsel %vm185, %v399, 0
    %406 = vmatprep.subr.bf16.mxu0 0
    %407 = vmatpush1.bf16.msra.mxu0 %v368
    %408 = vmatprep.subr.bf16.mxu0 0
    %409 = vmatpush1.bf16.msra.mxu0 %v369
    %410 = vmatprep.subr.bf16.mxu0 0
    %411 = vmatpush1.bf16.msra.mxu0 0
    %412 = vmatprep.subr.bf16.mxu0 0
    %413 = vmatpush1.bf16.msra.mxu0 0
    %414 = vmatprep.subr.bf16.mxu0 0
    %415 = vmatpush1.bf16.msra.mxu0 0
    %416 = vmatprep.subr.bf16.mxu0 0
    %417 = vmatpush1.bf16.msra.mxu0 0
    %418 = vmatprep.subr.bf16.mxu0 0
    %419 = vmatpush1.bf16.msra.mxu0 0
    %420 = vmatprep.subr.bf16.mxu0 0
    %421 = vmatpush1.bf16.msra.mxu0 0
    %422 = vmatprep.subr.bf16.mxu0 0
    %423 = vmatpush1.bf16.msra.mxu0 0
    %424 = vmatprep.subr.bf16.mxu0 0
    %425 = vmatpush1.bf16.msra.mxu0 0
    %426 = vmatprep.subr.bf16.mxu0 0
    %427 = vmatpush1.bf16.msra.mxu0 0
    %428 = vmatprep.subr.bf16.mxu0 0
    %429 = vmatpush1.bf16.msra.mxu0 0
    %430 = vmatprep.subr.bf16.mxu0 0
    %431 = vmatpush1.bf16.msra.mxu0 0
    %432 = vmatprep.subr.bf16.mxu0 0
    %433 = vmatpush1.bf16.msra.mxu0 0
    %434 = vmatprep.subr.bf16.mxu0 0
    %435 = vmatpush1.bf16.msra.mxu0 0
    %436 = vmatprep.subr.bf16.mxu0 0
    %437 = vmatpush1.bf16.msra.mxu0 0
    %438 = vmatprep.mubr.bf16.mxu0 0
    %439 = vmatmul.mubr.bf16.gmra.mrb[0].mxu0 %v401
    %v440 = vpop.f32.mrb[0].mxu0
    %v441 = vadd.f32 %v373, %v440
    %v442 = vpop.f32.mrb[0].mxu0
    %v443 = vpop.f32.mrb[0].mxu0
    %v444 = vadd.f32 %v378, %v443
    %v445 = vpop.f32.mrb[0].mxu0
    %446 = vmatprep.mubr.bf16.mxu0 0
    %447 = vmatmul.mubr.bf16.gmra.mrb[0].mxu0 %v404
    %v448 = vpop.f32.mrb[0].mxu0
    %v449 = vadd.f32 %v383, %v448
    %v450 = vpop.f32.mrb[0].mxu0
    %v451 = vpop.f32.mrb[0].mxu0
    %v452 = vadd.f32 %v388, %v451
    %v453 = vpop.f32.mrb[0].mxu0
    %454 = vdwg.mxu0
    %vm455 = vcmp.gt.f32.partialorder %v441, 0.0
    %vm456 = vcmp.gt.f32.partialorder %v444, 0.0
    %vm457 = vcmp.gt.f32.partialorder %v449, 0.0
    %vm458 = vcmp.gt.f32.partialorder %v452, 0.0
    %v459 = vmul.f32 %v441, 0.01
    %v460 = vmul.f32 %v444, 0.01
    %v461 = vmul.f32 %v449, 0.01
    %v462 = vmul.f32 %v452, 0.01
    %v463 = vsel %vm455, %v441, %v459
    %v464 = vsel %vm456, %v444, %v460
    %v465 = vsel %vm457, %v449, %v461
    %v466 = vsel %vm458, %v452, %v462
    %v467 = vld [vmem:[%s9] sm:$0xff]
    %v468 = vld [vmem:[%s9 + $0x8] sm:$0xff]
    %v469 = vld [vmem:[%s9 + $0x10] sm:$0xff]
    %v470 = vld [vmem:[%s9 + $0x18] sm:$0xff]
    %v471 = vld [vmem:[#allocation2] sm:$0x1]
    %473 = vset.pattern.permute.xlu0 0
    %474 = vperm.xlu0 %473, %v467
    %v475 = vpop.permute.xlu0 %474
    %478 = vset.pattern.permute.xlu0 0
    %479 = vperm.xlu0 %478, %v468
    %v480 = vpop.permute.xlu0 %479
    %483 = vset.pattern.permute.xlu0 0
    %484 = vperm.xlu0 %483, %v469
    %v485 = vpop.permute.xlu0 %484
    %488 = vset.pattern.permute.xlu0 0
    %489 = vperm.xlu0 %488, %v470
    %v490 = vpop.permute.xlu0 %489
    %v492 = vmul.f32 %v463, %v475
    %v493 = vmul.f32 %v464, %v480
    %v494 = vmul.f32 %v465, %v485
    %v495 = vmul.f32 %v466, %v490
    %v496 = vadd.f32 %v492, %v493
    %v497 = vadd.f32 %v496, %v494
    %v498 = vadd.f32 %v497, %v495
    %v499 = vrot.slane %v498, 4
    %v500 = vadd.f32 %v498, %v499
    %v501 = vrot.slane %v500, 2
    %v502 = vadd.f32 %v500, %v501
    %v503 = vrot.slane %v502, 1
    %v504 = vadd.f32 %v502, %v503
    %506 = vset.pattern.permute.xlu0 0
    %507 = vperm.xlu0 %506, %v471
    %v508 = vpop.permute.xlu0 %507
    %v510 = vlaneseq
    %v511 = vshrl.u32 %v510, 7
    %v512 = vsub.s32 0, %v511
    %v513 = vrot.slane %v508, %v512
    %v514 = vadd.f32 %v504, %v513
    %515 = vst [vmem:[#allocation3] sm:$0x1] %v514
    // Predicated region
    $region46: #{tpu_custom_call.1} parent=1 // pred_check
      _
    $region47: #{tpu_custom_call.1} parent=1 // pred_check_branch
      %517 = sbr.rel (0) target = $region49
    $region48: #{tpu_custom_call.1} parent=1 // pred_region
      %s519 = ssub.s32 16, 16
      %520 = vsyncadd [#allocation4], %s519
      %s522 = sshll.u32 [#allocation3], 4
      %s523 = int_to_ptr.vmem [resolvable:$true] %s522
      %525 = dma.vmem_to_hbm [thread:$0]  %s523, 16, %s11, [#allocation4]
    $region49: #{tpu_custom_call.1} parent=1 // pred_fallthru
      _
    // Predicated region
    $region50: #{tpu_custom_call.1} parent=1 // pred_check
      _
    $region51: #{tpu_custom_call.1} parent=1 // pred_check_branch
      %527 = sbr.rel (0) target = $region53
    $region52: #{tpu_custom_call.1} parent=1 // pred_region
      %528 = dma.done [#allocation4], 16
    $region53: #{tpu_custom_call.1} parent=1 // pred_fallthru
      _
    %529 = vsyncpa [#allocation4], 1

</llo_original>
